<compile_context>
chip_gen: v7x
topology: tpu7x:2x2x1
jax: 0.10.0
libtpu: 0.0.40
codegen_flags: <defaults>
</compile_context>

<pallas_src>
from functools import partial

import jax
import jax.numpy as jnp
from jax.experimental import pallas as pl
from jax.experimental.pallas import tpu as pltpu

KERNELS = (3, 4, 5)
LANE = 128


def _round_up(v, m):
    return ((v + m - 1) // m) * m


def kimcnn_kernel(x_ref, w_conv_ref, b_conv_ref, w_lin_ref, b_lin_ref,
                  tail_mask_ref, out_ref, xp_ref, *,
                  seq_len, kernels, l_pad, front):
    """One batch tile per grid step.

    x_ref         : (TB, S, D)        f32, raw input tile
    w_conv_ref    : (k_max*D, Fp)     bf16, fused/packed conv weights
    b_conv_ref    : (1, Fp)           f32, concatenated conv biases
    w_lin_ref     : (Fp, Fo)          bf16, padded linear weight (pre-transposed)
    b_lin_ref     : (1, Fo)           f32, padded linear bias
    tail_mask_ref : (l_pad - S, Fp)   f32, additive validity mask (0 / -1e30)
    out_ref       : (TB, Fo)          f32
    xp_ref        : (TB, P, D)        bf16 scratch, zero-padded copy of x
    """
    k_max = max(kernels)
    halo = k_max - 2
    base = front - halo                      # scratch row of logical pad index 0
    TB = x_ref.shape[0]
    D = x_ref.shape[2]
    P = xp_ref.shape[1]
    Fp = w_conv_ref.shape[1]

    # Build the zero-padded bf16 copy of x in VMEM.  Halo regions are re-zeroed
    # every step (cheap, and correct under any core sharding of the grid).
    xp_ref[:, :front, :] = jnp.zeros((TB, front, D), xp_ref.dtype)
    xp_ref[:, front + seq_len:, :] = jnp.zeros((TB, P - front - seq_len, D),
                                               xp_ref.dtype)
    xp_ref[:, front:front + seq_len, :] = x_ref[...].astype(xp_ref.dtype)

    if D >= 128:
        # Realistic embedding dims: unrolled tap accumulation, no im2col copy.
        acc = jnp.zeros((TB * l_pad, Fp), jnp.float32)
        for dt in range(k_max):
            win = xp_ref[:, base + dt:base + dt + l_pad, :]
            acc = acc + jnp.dot(win.reshape(TB * l_pad, D),
                                w_conv_ref[dt * D:(dt + 1) * D, :],
                                preferred_element_type=jnp.float32)
        conv = acc.reshape(TB, l_pad, Fp)
    else:
        # Toy-sized D: one fused im2col GEMM keeps the MXU contraction deep.
        xc = jnp.concatenate(
            [xp_ref[:, base + dt:base + dt + l_pad, :] for dt in range(k_max)],
            axis=-1).reshape(TB * l_pad, k_max * D)
        conv = jnp.dot(xc, w_conv_ref[...],
                       preferred_element_type=jnp.float32).reshape(TB, l_pad, Fp)

    # Max over time.  Rows [0, S) are valid for every kernel size; only the
    # short tail (group-dependent valid length + alignment padding) needs the
    # precomputed additive mask.
    head_max = jnp.max(conv[:, :seq_len, :], axis=1)                 # (TB, Fp)
    tail_max = jnp.max(conv[:, seq_len:, :] + tail_mask_ref[...][None], axis=1)
    # Per-filter bias is constant over time => adding it after the max is
    # equivalent to adding it before.
    pooled = jnp.maximum(head_max, tail_max) + b_conv_ref[...]       # (TB, Fp) f32

    # TODO(synk): nn.Dropout(p=0.2) is identity in eval mode; not implemented.
    h = jnp.maximum(pooled, 0.0)                                     # ReLU
    out = jnp.dot(h.astype(w_lin_ref.dtype), w_lin_ref[...],
                  preferred_element_type=jnp.float32) + b_lin_ref[...]
    out_ref[...] = out.astype(out_ref.dtype)


def kimcnn_pack_params(params, kernels=KERNELS):
    """One-time weight packing (hoisted out of the forward path)."""
    F = params["b_lin"].shape[-1]
    nK = len(kernels)
    k_max = max(kernels)
    D = params[f"w{kernels[0]}"].shape[1]
    Fp = _round_up(nK * F, LANE)        # padded concat width  (3F -> 128)
    Fo = _round_up(F, LANE)             # padded output width  (F  -> 128)

    # Fused conv weight: rows = (tap, emb_dim), cols = [conv_k0 | conv_k1 | ...]
    # lane-padded.  Each conv's taps are right-aligned in the k_max-tap window
    # (this matches Conv2d padding=(k-2, 0) with a common halo of k_max-2).
    w_conv = jnp.zeros((k_max * D, Fp), jnp.float32)
    b_conv = jnp.zeros((1, Fp), jnp.float32)
    for j, k in enumerate(kernels):
        wk = params[f"w{k}"]                        # (k, D, F)
        off = k_max - k
        w_conv = w_conv.at[off * D:(off + k) * D, j * F:(j + 1) * F].set(
            wk.reshape(k * D, F))
        b_conv = b_conv.at[:, j * F:(j + 1) * F].set(params[f"b{k}"].reshape(1, F))

    w_lin = jnp.zeros((Fp, Fo), jnp.float32).at[:nK * F, :F].set(params["w_lin"])
    b_lin = jnp.zeros((1, Fo), jnp.float32).at[:, :F].set(params["b_lin"].reshape(1, F))

    return {
        "w_conv": w_conv.astype(jnp.bfloat16),
        "b_conv": b_conv,
        "w_lin": w_lin.astype(jnp.bfloat16),
        "b_lin": b_lin,
        "n_filters": int(F),
        "word_emb_dim": int(D),
        "kernels": tuple(kernels),
    }


def kimcnn_forward(x, packed):
    """x: (B, S, D) float32 -> (B, F) float32."""
    B, S, D = x.shape
    F = packed["n_filters"]
    kernels = packed["kernels"]
    k_max = max(kernels)
    halo = k_max - 2
    Fp = packed["w_conv"].shape[1]
    Fo = packed["w_lin"].shape[1]

    L = S + k_max - 3                         # longest conv output length
    L_pad = _round_up(L, 16)                  # sublane-aligned im2col rows (bf16)
    front = _round_up(max(halo, 8), 8)        # aligned leading-zero block in scratch
    P = _round_up(front - halo + L_pad + k_max - 1, 8)   # padded scratch length

    # Tail validity mask (0 where the time position is a real output of that
    # kernel-size group, -1e30 otherwise); covers both the per-group trailing
    # rows and the L->L_pad alignment padding.  Precomputed once per call.
    tail = L_pad - S
    t_idx = S + jnp.arange(tail)
    c_idx = jnp.arange(Fp)
    tail_mask = jnp.full((tail, Fp), -1e30, jnp.float32)
    for j, k in enumerate(kernels):
        ok = ((t_idx[:, None] < (S + k - 3))
              & (c_idx[None, :] >= j * F) & (c_idx[None, :] < (j + 1) * F))
        tail_mask = jnp.where(ok, 0.0, tail_mask)

    # ---- batch tiling: cap TB at 128, keep an even tile count (v7x has 2 TCs) ----
    if B <= 8:
        TB, n_tiles = B, 1
    else:
        TB_target = 128
        n_tiles = 2 * pl.cdiv(B, 2 * TB_target)
        TB = _round_up(pl.cdiv(B, n_tiles), 8)
        n_tiles = pl.cdiv(B, TB)
        if n_tiles > 1 and n_tiles % 2:
            n_tiles += 1
    B_pad = TB * n_tiles
    x_in = x if B_pad == B else jnp.pad(x, ((0, B_pad - B), (0, 0), (0, 0)))

    # ---- explicit VMEM limit derived from the live set (stays under v7x's 64 MiB) ----
    use_im2col = D < 128
    vmem_bytes = (
        2 * TB * S * D * 4                       # double-buffered f32 input tiles
        + TB * P * D * 2                         # bf16 padded scratch
        + k_max * D * Fp * 2 + Fp * 4            # conv weights + bias
        + Fp * Fo * 2 + Fo * 4                   # linear weights + bias
        + tail * Fp * 4                          # tail mask
        + TB * L_pad * Fp * 4                    # f32 conv activations
        + (TB * L_pad * k_max * D * 2 if use_im2col else TB * L_pad * Fp * 4)
        + 2 * TB * Fo * 4)                       # double-buffered output tiles
    vmem_limit = int(min(56 * 2 ** 20, max(32 * 2 ** 20, int(1.5 * vmem_bytes))))

    out = pl.pallas_call(
        partial(kimcnn_kernel, seq_len=S, kernels=kernels,
                l_pad=L_pad, front=front),
        out_shape=jax.ShapeDtypeStruct((B_pad, Fo), jnp.float32),
        grid=(n_tiles,),
        in_specs=[
            pl.BlockSpec((TB, S, D), lambda b: (b, 0, 0)),
            pl.BlockSpec((k_max * D, Fp), lambda b: (0, 0)),
            pl.BlockSpec((1, Fp), lambda b: (0, 0)),
            pl.BlockSpec((Fp, Fo), lambda b: (0, 0)),
            pl.BlockSpec((1, Fo), lambda b: (0, 0)),
            pl.BlockSpec((tail, Fp), lambda b: (0, 0)),
        ],
        out_specs=pl.BlockSpec((TB, Fo), lambda b: (b, 0)),
        scratch_shapes=[pltpu.VMEM((TB, P, D), jnp.bfloat16)],
        compiler_params=pltpu.CompilerParams(
            dimension_semantics=("parallel",),
            vmem_limit_bytes=vmem_limit),
    )(x_in, packed["w_conv"], packed["b_conv"], packed["w_lin"],
      packed["b_lin"], tail_mask)

    return out[:B, :F]


def kimcnn_reference(x, params, kernels=KERNELS):
    """Pure-JAX f32 reference using lax conv (mirrors the PyTorch forward)."""
    pooled = []
    for k in kernels:
        w = params[f"w{k}"]                                   # (k, D, F)
        b = params[f"b{k}"]
        rhs = jnp.transpose(w, (2, 0, 1))[:, None, :, :]      # (F, 1, k, D)
        lhs = x[:, None, :, :]                                # (B, 1, S, D)
        conv = jax.lax.conv_general_dilated(
            lhs, rhs, window_strides=(1, 1),
            padding=((k - 2, k - 2), (0, 0)),
            dimension_numbers=("NCHW", "OIHW", "NCHW"))       # (B, F, L, 1)
        conv = conv[..., 0] + b[None, :, None]                # (B, F, L)
        pooled.append(jnp.max(conv, axis=2))                  # (B, F)
    cat = jnp.concatenate(pooled, axis=1)                     # (B, 3F)
    h = jnp.maximum(cat, 0.0)
    return h @ params["w_lin"] + params["b_lin"]


if __name__ == "__main__":
    B, S, D, F = 2, 16, 32, 16   # batch, seq_len, word_emb_dim, n_filters

    key = jax.random.PRNGKey(0)
    keys = jax.random.split(key, 10)
    x = jax.random.normal(keys[0], (B, S, D), dtype=jnp.float32)

    params = {}
    for i, k in enumerate(KERNELS):
        params[f"w{k}"] = 0.1 * jax.random.normal(
            keys[1 + 2 * i], (k, D, F), dtype=jnp.float32)
        params[f"b{k}"] = 0.1 * jax.random.normal(
            keys[2 + 2 * i], (F,), dtype=jnp.float32)
    params["w_lin"] = 0.1 * jax.random.normal(
        keys[7], (F * len(KERNELS), F), dtype=jnp.float32)
    params["b_lin"] = 0.1 * jax.random.normal(
        keys[8], (F,), dtype=jnp.float32)

    packed = kimcnn_pack_params(params)          # one-time packing
    out = kimcnn_forward(x, packed)
    out = jax.block_until_ready(out)
    assert out.shape == (B, F), out.shape

    ref = kimcnn_reference(x, params)
    if not jnp.allclose(out, ref, atol=5e-2, rtol=5e-2):
        raise AssertionError(
            f"Pallas output does not match reference; max abs err = "
            f"{float(jnp.max(jnp.abs(out - ref)))}")

    print("KERNEL_OK")
</pallas_src>

<mosaic_0001>
module attributes {stable_mosaic.version = 11 : i64} {
  func.func @kimcnn_kernel(%arg0: i32, %arg1: memref<2x16x32xf32, #tpu.memory_space<vmem>>, %arg2: memref<160x128xbf16, #tpu.memory_space<vmem>>, %arg3: memref<1x128xf32, #tpu.memory_space<vmem>>, %arg4: memref<128x128xbf16, #tpu.memory_space<vmem>>, %arg5: memref<1x128xf32, #tpu.memory_space<vmem>>, %arg6: memref<16x128xf32, #tpu.memory_space<vmem>>, %arg7: memref<2x128xf32, #tpu.memory_space<vmem>>, %arg8: memref<2x48x32xbf16, #tpu.memory_space<vmem>>) attributes {dimension_semantics = [#tpu.dimension_semantics<parallel>], iteration_bounds = array<i64: 1>, scalar_prefetch = 0 : i64, scratch_operands = 1 : i64, tpu.core_type = #tpu.core_type<tc>, window_params = [{transform_indices = @transform_0, window_bounds = array<i64: 2, 16, 32>}, {pipeline_mode = #tpu.pipeline_mode<synchronous>, transform_indices = @transform_1, window_bounds = array<i64: 160, 128>}, {pipeline_mode = #tpu.pipeline_mode<synchronous>, transform_indices = @transform_2, window_bounds = array<i64: 1, 128>}, {pipeline_mode = #tpu.pipeline_mode<synchronous>, transform_indices = @transform_3, window_bounds = array<i64: 128, 128>}, {pipeline_mode = #tpu.pipeline_mode<synchronous>, transform_indices = @transform_4, window_bounds = array<i64: 1, 128>}, {pipeline_mode = #tpu.pipeline_mode<synchronous>, transform_indices = @transform_5, window_bounds = array<i64: 16, 128>}, {transform_indices = @transform_6, window_bounds = array<i64: 2, 128>}]} {
    %cst = arith.constant 0.000000e+00 : bf16
    %0 = vector.broadcast %cst : bf16 to vector<2x8x32xbf16>
    %c0 = arith.constant 0 : index
    %c0_0 = arith.constant 0 : index
    %c0_1 = arith.constant 0 : index
    %1 = vector.load %arg8[%c0, %c0_0, %c0_1] : memref<2x48x32xbf16, #tpu.memory_space<vmem>>, vector<2x8x32xbf16>
    tpu.vector_store %arg8[%c0, %c0_0, %c0_1], %0 {strides = array<i32>} : memref<2x48x32xbf16, #tpu.memory_space<vmem>>, vector<2x8x32xbf16>,
    %cst_2 = arith.constant 0.000000e+00 : bf16
    %2 = vector.broadcast %cst_2 : bf16 to vector<2x24x32xbf16>
    %c0_3 = arith.constant 0 : index
    %c24 = arith.constant 24 : index
    %c0_4 = arith.constant 0 : index
    %3 = vector.load %arg8[%c0_3, %c24, %c0_4] : memref<2x48x32xbf16, #tpu.memory_space<vmem>>, vector<2x24x32xbf16>
    tpu.vector_store %arg8[%c0_3, %c24, %c0_4], %2 {strides = array<i32>} : memref<2x48x32xbf16, #tpu.memory_space<vmem>>, vector<2x24x32xbf16>,
    %c0_5 = arith.constant 0 : index
    %c0_6 = arith.constant 0 : index
    %c0_7 = arith.constant 0 : index
    %4 = vector.load %arg1[%c0_5, %c0_6, %c0_7] : memref<2x16x32xf32, #tpu.memory_space<vmem>>, vector<2x16x32xf32>
    %5 = arith.truncf %4 : vector<2x16x32xf32> to vector<2x16x32xbf16>
    %c0_8 = arith.constant 0 : index
    %c8 = arith.constant 8 : index
    %c0_9 = arith.constant 0 : index
    %6 = vector.load %arg8[%c0_8, %c8, %c0_9] : memref<2x48x32xbf16, #tpu.memory_space<vmem>>, vector<2x16x32xbf16>
    tpu.vector_store %arg8[%c0_8, %c8, %c0_9], %5 {strides = array<i32>} : memref<2x48x32xbf16, #tpu.memory_space<vmem>>, vector<2x16x32xbf16>,
    %c0_10 = arith.constant 0 : index
    %c5 = arith.constant 5 : index
    %c0_11 = arith.constant 0 : index
    %7 = vector.load %arg8[%c0_10, %c5, %c0_11] : memref<2x48x32xbf16, #tpu.memory_space<vmem>>, vector<2x32x32xbf16>
    %c0_12 = arith.constant 0 : index
    %c6 = arith.constant 6 : index
    %c0_13 = arith.constant 0 : index
    %8 = vector.load %arg8[%c0_12, %c6, %c0_13] : memref<2x48x32xbf16, #tpu.memory_space<vmem>>, vector<2x32x32xbf16>
    %c0_14 = arith.constant 0 : index
    %c7 = arith.constant 7 : index
    %c0_15 = arith.constant 0 : index
    %9 = vector.load %arg8[%c0_14, %c7, %c0_15] : memref<2x48x32xbf16, #tpu.memory_space<vmem>>, vector<2x32x32xbf16>
    %c0_16 = arith.constant 0 : index
    %c8_17 = arith.constant 8 : index
    %c0_18 = arith.constant 0 : index
    %10 = vector.load %arg8[%c0_16, %c8_17, %c0_18] : memref<2x48x32xbf16, #tpu.memory_space<vmem>>, vector<2x32x32xbf16>
    %c0_19 = arith.constant 0 : index
    %c9 = arith.constant 9 : index
    %c0_20 = arith.constant 0 : index
    %11 = vector.load %arg8[%c0_19, %c9, %c0_20] : memref<2x48x32xbf16, #tpu.memory_space<vmem>>, vector<2x32x32xbf16>
    %12 = tpu.concatenate %7, %8, %9, %10, %11 in 2 : vector<2x32x32xbf16>, vector<2x32x32xbf16>, vector<2x32x32xbf16>, vector<2x32x32xbf16>, vector<2x32x32xbf16> -> vector<2x32x160xbf16>
    %13 = vector.shape_cast %12 : vector<2x32x160xbf16> to vector<64x160xbf16>
    %c0_21 = arith.constant 0 : index
    %c0_22 = arith.constant 0 : index
    %14 = vector.load %arg2[%c0_21, %c0_22] : memref<160x128xbf16, #tpu.memory_space<vmem>>, vector<160x128xbf16>
    %cst_23 = arith.constant dense<0.000000e+00> : vector<64x128xf32>
    %15 = tpu.matmul %13, %14, %cst_23 {dimension_numbers = #tpu.dot_dimension_numbers<[1], [0], [0], [1], [0, 0, 1, 1], [], []>} : vector<64x160xbf16>, vector<160x128xbf16>, vector<64x128xf32> -> vector<64x128xf32>
    %16 = vector.shape_cast %15 : vector<64x128xf32> to vector<2x32x128xf32>
    %17 = vector.extract_strided_slice %16 {offsets = [0, 0, 0], sizes = [2, 16, 128], strides = [1, 1, 1]} : vector<2x32x128xf32> to vector<2x16x128xf32>
    %cst_24 = arith.constant dense<0xFF800000> : vector<2x128xf32>
    %18 = vector.multi_reduction <maximumf>, %17, %cst_24 [1] : vector<2x16x128xf32> to vector<2x128xf32>
    %19 = vector.extract_strided_slice %16 {offsets = [0, 16, 0], sizes = [2, 16, 128], strides = [1, 1, 1]} : vector<2x32x128xf32> to vector<2x16x128xf32>
    %c0_25 = arith.constant 0 : index
    %c0_26 = arith.constant 0 : index
    %20 = vector.load %arg6[%c0_25, %c0_26] : memref<16x128xf32, #tpu.memory_space<vmem>>, vector<16x128xf32>
    %21 = vector.shape_cast %20 : vector<16x128xf32> to vector<1x16x128xf32>
    %22 = vector.broadcast %21 : vector<1x16x128xf32> to vector<2x16x128xf32>
    %23 = arith.addf %19, %22 : vector<2x16x128xf32>
    %cst_27 = arith.constant dense<0xFF800000> : vector<2x128xf32>
    %24 = vector.multi_reduction <maximumf>, %23, %cst_27 [1] : vector<2x16x128xf32> to vector<2x128xf32>
    %25 = arith.maximumf %18, %24 : vector<2x128xf32>
    %c0_28 = arith.constant 0 : index
    %c0_29 = arith.constant 0 : index
    %26 = vector.load %arg3[%c0_28, %c0_29] : memref<1x128xf32, #tpu.memory_space<vmem>>, vector<1x128xf32>
    %27 = vector.broadcast %26 : vector<1x128xf32> to vector<2x128xf32>
    %28 = arith.addf %25, %27 : vector<2x128xf32>
    %cst_30 = arith.constant 0.000000e+00 : f32
    %29 = vector.broadcast %cst_30 : f32 to vector<2x128xf32>
    %30 = arith.maximumf %28, %29 : vector<2x128xf32>
    %31 = arith.truncf %30 : vector<2x128xf32> to vector<2x128xbf16>
    %c0_31 = arith.constant 0 : index
    %c0_32 = arith.constant 0 : index
    %32 = vector.load %arg4[%c0_31, %c0_32] : memref<128x128xbf16, #tpu.memory_space<vmem>>, vector<128x128xbf16>
    %cst_33 = arith.constant dense<0.000000e+00> : vector<2x128xf32>
    %33 = tpu.matmul %31, %32, %cst_33 {dimension_numbers = #tpu.dot_dimension_numbers<[1], [0], [0], [1], [0, 0, 1, 1], [], []>} : vector<2x128xbf16>, vector<128x128xbf16>, vector<2x128xf32> -> vector<2x128xf32>
    %c0_34 = arith.constant 0 : index
    %c0_35 = arith.constant 0 : index
    %34 = vector.load %arg5[%c0_34, %c0_35] : memref<1x128xf32, #tpu.memory_space<vmem>>, vector<1x128xf32>
    %35 = vector.broadcast %34 : vector<1x128xf32> to vector<2x128xf32>
    %36 = arith.addf %33, %35 : vector<2x128xf32>
    %c0_36 = arith.constant 0 : index
    %c0_37 = arith.constant 0 : index
    %37 = vector.load %arg7[%c0_36, %c0_37] : memref<2x128xf32, #tpu.memory_space<vmem>>, vector<2x128xf32>
    tpu.vector_store %arg7[%c0_36, %c0_37], %36 {strides = array<i32>} : memref<2x128xf32, #tpu.memory_space<vmem>>, vector<2x128xf32>,
    return
  }
  func.func @transform_0(%arg0: i32) -> (i32, i32, i32) {
    %c0_i32 = arith.constant 0 : i32
    %c0_i32_0 = arith.constant 0 : i32
    %c0_i32_1 = arith.constant 0 : i32
    return %arg0, %c0_i32, %c0_i32_0 : i32, i32, i32
  }
  func.func @transform_1(%arg0: i32) -> (i32, i32) {
    %c0_i32 = arith.constant 0 : i32
    %c0_i32_0 = arith.constant 0 : i32
    %c0_i32_1 = arith.constant 0 : i32
    return %c0_i32, %c0_i32_0 : i32, i32
  }
  func.func @transform_2(%arg0: i32) -> (i32, i32) {
    %c0_i32 = arith.constant 0 : i32
    %c0_i32_0 = arith.constant 0 : i32
    %c0_i32_1 = arith.constant 0 : i32
    return %c0_i32, %c0_i32_0 : i32, i32
  }
  func.func @transform_3(%arg0: i32) -> (i32, i32) {
    %c0_i32 = arith.constant 0 : i32
    %c0_i32_0 = arith.constant 0 : i32
    %c0_i32_1 = arith.constant 0 : i32
    return %c0_i32, %c0_i32_0 : i32, i32
  }
  func.func @transform_4(%arg0: i32) -> (i32, i32) {
    %c0_i32 = arith.constant 0 : i32
    %c0_i32_0 = arith.constant 0 : i32
    %c0_i32_1 = arith.constant 0 : i32
    return %c0_i32, %c0_i32_0 : i32, i32
  }
  func.func @transform_5(%arg0: i32) -> (i32, i32) {
    %c0_i32 = arith.constant 0 : i32
    %c0_i32_0 = arith.constant 0 : i32
    %c0_i32_1 = arith.constant 0 : i32
    return %c0_i32, %c0_i32_0 : i32, i32
  }
  func.func @transform_6(%arg0: i32) -> (i32, i32) {
    %c0_i32 = arith.constant 0 : i32
    %c0_i32_0 = arith.constant 0 : i32
    return %arg0, %c0_i32 : i32, i32
  }
}

</mosaic_0001>

<llo_original>
// kernel: tpu_custom_call.1
$region0: #{tpu_custom_call.1}
  #allocation0 [shape = 'u32[]', space=smem, size = 0x4, offset = 0x4, fixed_abs, tag = 'smem constant byte address 0x4 - core index']
  #allocation1 [shape = 'u32[144,128]{1,0:T(1,128)}', space=vmem, size = 0x12000, scoped, tag = 'internal scratch']
  #allocation2 [shape = 'bf16[2,48,32]{2,1,0:T(16,128)(2,1)}', space=vmem, size = 0x6000, scoped, tag = 'scratch operand']
  %s0 = inlined_call_operand.hbm [shape: f32[2,16,32], index: 0, kind: input, shape index: {}]
  %s1 = inlined_call_operand.hbm [shape: bf16[160,128], index: 1, kind: input, shape index: {}]
  %s2 = inlined_call_operand.vmem [shape: f32[1,128], index: 2, kind: input, shape index: {}]
  %s3 = inlined_call_operand.hbm [shape: bf16[128,128], index: 3, kind: input, shape index: {}]
  %s4 = inlined_call_operand.vmem [shape: f32[1,128], index: 4, kind: input, shape index: {}]
  %s5 = inlined_call_operand.vmem [shape: f32[16,128], index: 5, kind: input, shape index: {}]
  %s6 = inlined_call_operand.hbm [shape: f32[2,128], index: 6, kind: output, shape index: {}]
  %s7 = sld [smem:[#allocation0]]
  $region46: #{tpu_custom_call.1} parent=0
    _
  %s9 = ssub.s32 1, %s7
  %s10 = scalar_select 0, %s9, %s7
  $region1: #{tpu_custom_call.1} parent=0
    #allocation3 [shape = 'u8[16384]{0}', space=vmem, size = 0x4000, scoped, tag = 'input window, operand 0, single buffered']
    #allocation4 [shape = 's32[1]{0}', space=sflag, size = 0x4, scoped, tag = 'scoped memory for tpu_custom_call.1']
    #allocation5 [shape = 's32[1]{0}', space=sflag, size = 0x4, scoped, tag = 'scoped memory for tpu_custom_call.1']
    #allocation6 [shape = 'u8[40960]{0}', space=vmem, size = 0xa000, scoped, tag = 'input window, operand 1, single buffered']
    #allocation7 [shape = 's32[1]{0}', space=sflag, size = 0x4, scoped, tag = 'scoped memory for tpu_custom_call.1']
    #allocation8 [shape = 'u8[32768]{0}', space=vmem, size = 0x8000, scoped, tag = 'input window, operand 3, single buffered']
    #allocation9 [shape = 'u8[1024]{0}', space=vmem, size = 0x400, scoped, tag = 'output window, operand 0, single buffered']
    %11 = vsyncpa [#allocation4], 0
    %12 = vsyncpa [#allocation7], 0
    %13 = vsyncpa [#allocation5], 0
    // Predicated region
    $region2: #{tpu_custom_call.1} parent=1 // pred_check
      _
    $region3: #{tpu_custom_call.1} parent=1 // pred_check_branch
      %15 = sbr.rel (0) target = $region5
    $region4: #{tpu_custom_call.1} parent=1 // pred_region
      %s17 = ssub.s32 512, 512
      %18 = vsyncadd [#allocation4], %s17
      %s19 = sshll.u32 [#allocation3], 4
      %s20 = int_to_ptr.vmem [resolvable:$true] %s19
      %25 = dma.hbm_to_vmem [thread:$0]  %s0, 512, %s20, [#allocation4], 128, 128, 8
    $region5: #{tpu_custom_call.1} parent=1 // pred_fallthru
      _
    // Predicated region
    $region6: #{tpu_custom_call.1} parent=1 // pred_check
      _
    $region7: #{tpu_custom_call.1} parent=1 // pred_check_branch
      %27 = sbr.rel (0) target = $region9
    $region8: #{tpu_custom_call.1} parent=1 // pred_region
      %s29 = ssub.s32 1280, 1280
      %30 = vsyncadd [#allocation7], %s29
      %s31 = sshll.u32 [#allocation6], 4
      %s32 = int_to_ptr.vmem [resolvable:$true] %s31
      %37 = dma.hbm_to_vmem [thread:$0]  %s1, 1280, %s32, [#allocation7], 64, 64, 4
    $region9: #{tpu_custom_call.1} parent=1 // pred_fallthru
      _
    // Predicated region
    $region10: #{tpu_custom_call.1} parent=1 // pred_check
      _
    $region11: #{tpu_custom_call.1} parent=1 // pred_check_branch
      %39 = sbr.rel (0) target = $region13
    $region12: #{tpu_custom_call.1} parent=1 // pred_region
      _
    $region13: #{tpu_custom_call.1} parent=1 // pred_fallthru
      _
    // Predicated region
    $region14: #{tpu_custom_call.1} parent=1 // pred_check
      _
    $region15: #{tpu_custom_call.1} parent=1 // pred_check_branch
      %41 = sbr.rel (0) target = $region17
    $region16: #{tpu_custom_call.1} parent=1 // pred_region
      %s43 = ssub.s32 1024, 1024
      %44 = vsyncadd [#allocation7], %s43
      %s45 = sshll.u32 [#allocation8], 4
      %s46 = int_to_ptr.vmem [resolvable:$true] %s45
      %51 = dma.hbm_to_vmem [thread:$0]  %s3, 1024, %s46, [#allocation7], 64, 64, 4
    $region17: #{tpu_custom_call.1} parent=1 // pred_fallthru
      _
    // Predicated region
    $region18: #{tpu_custom_call.1} parent=1 // pred_check
      _
    $region19: #{tpu_custom_call.1} parent=1 // pred_check_branch
      %53 = sbr.rel (0) target = $region21
    $region20: #{tpu_custom_call.1} parent=1 // pred_region
      _
    $region21: #{tpu_custom_call.1} parent=1 // pred_fallthru
      _
    // Predicated region
    $region22: #{tpu_custom_call.1} parent=1 // pred_check
      _
    $region23: #{tpu_custom_call.1} parent=1 // pred_check_branch
      %55 = sbr.rel (0) target = $region25
    $region24: #{tpu_custom_call.1} parent=1 // pred_region
      _
    $region25: #{tpu_custom_call.1} parent=1 // pred_fallthru
      _
    // Predicated region
    $region26: #{tpu_custom_call.1} parent=1 // pred_check
      _
    $region27: #{tpu_custom_call.1} parent=1 // pred_check_branch
      %57 = sbr.rel (0) target = $region29
    $region28: #{tpu_custom_call.1} parent=1 // pred_region
      %58 = dma.done [#allocation4], 512
    $region29: #{tpu_custom_call.1} parent=1 // pred_fallthru
      _
    // Predicated region
    $region30: #{tpu_custom_call.1} parent=1 // pred_check
      _
    $region31: #{tpu_custom_call.1} parent=1 // pred_check_branch
      %60 = sbr.rel (0) target = $region33
    $region32: #{tpu_custom_call.1} parent=1 // pred_region
      %61 = dma.done [#allocation7], 1280
    $region33: #{tpu_custom_call.1} parent=1 // pred_fallthru
      _
    // Predicated region
    $region34: #{tpu_custom_call.1} parent=1 // pred_check
      _
    $region35: #{tpu_custom_call.1} parent=1 // pred_check_branch
      %63 = sbr.rel (0) target = $region37
    $region36: #{tpu_custom_call.1} parent=1 // pred_region
      %64 = dma.done [#allocation7], 1024
    $region37: #{tpu_custom_call.1} parent=1 // pred_fallthru
      _
    %vm66 = vcmask 257024
    %67 = vst.msk [vmem:[#allocation2] sm:$0xf] %vm66, 0
    %68 = vst.msk [vmem:[#allocation2 + $0x18] sm:$0xf] %vm66, 0
    %vm69 = vcmask 261124
    %70 = vst.msk [vmem:[#allocation2 + $0x8] sm:$0xf0] %vm69, 0
    %vm71 = vcmask 261120
    %72 = vst.msk [vmem:[#allocation2 + $0x10] sm:$0xff] %vm71, 0
    %73 = vst.msk [vmem:[#allocation2 + $0x20] sm:$0xf0] %vm69, 0
    %74 = vst.msk [vmem:[#allocation2 + $0x28] sm:$0xff] %vm71, 0
    %v75 = vld [vmem:[#allocation3] sm:$0xff]
    %v76 = vld [vmem:[#allocation3 + $0x8] sm:$0xff]
    %v77 = vld [vmem:[#allocation3 + $0x10] sm:$0xff]
    %v78 = vld [vmem:[#allocation3 + $0x18] sm:$0xff]
    %v79 = vpack.c.bf16 %v76, %v75
    %v80 = vpack.c.bf16 %v78, %v77
    %v83 = vrot.slane %v79, 4
    %v84 = vrot.slane %v80, 4
    %87 = vst.msk [vmem:[#allocation2] sm:$0xf0] %vm69, %v83
    %88 = vst.msk [vmem:[#allocation2 + $0x8] sm:$0xf] %vm66, %v83
    %89 = vst.msk [vmem:[#allocation2 + $0x18] sm:$0xf0] %vm69, %v84
    %90 = vst.msk [vmem:[#allocation2 + $0x20] sm:$0xf] %vm66, %v84
    %v91 = vld [vmem:[#allocation2] sm:$0xfc]
    %v92 = vld [vmem:[#allocation2 + $0x8] sm:$0xff]
    %v93 = vld [vmem:[#allocation2 + $0x10] sm:$0x7]
    %v94 = vld [vmem:[#allocation2 + $0x18] sm:$0xfc]
    %v95 = vld [vmem:[#allocation2 + $0x20] sm:$0xff]
    %v96 = vld [vmem:[#allocation2 + $0x28] sm:$0x7]
    %v97 = vld [vmem:[#allocation2] sm:$0xf8]
    %v98 = vld [vmem:[#allocation2 + $0x18] sm:$0xf8]
    %v99 = vld [vmem:[#allocation2 + $0x10] sm:$0xf]
    %v100 = vld [vmem:[#allocation2 + $0x28] sm:$0xf]
    %v101 = vld [vmem:[#allocation2] sm:$0xf0]
    %v102 = vld [vmem:[#allocation2 + $0x18] sm:$0xf0]
    %v103 = vld [vmem:[#allocation2 + $0x10] sm:$0x1f]
    %v104 = vld [vmem:[#allocation2 + $0x28] sm:$0x1f]
    %vm105 = vsmask.f32 7424
    %v107 = vshrl.u32 %v97, 16
    %v109 = vshll.u32 %v97, 16
    %v111 = vrot.slane %v109, 1
    %v112 = vor.u32 %v107, %v111
    %v114 = vshll.u32 %v92, 16
    %v116 = vrot.slane %v114, 1
    %v117 = vsel %vm105, %v112, %v116
    %v118 = vshrl.u32 %v92, 16
    %v120 = vor.u32 %v118, %v116
    %v122 = vshll.u32 %v93, 16
    %v124 = vrot.slane %v122, 1
    %v125 = vsel %vm105, %v120, %v124
    %v126 = vshrl.u32 %v93, 16
    %v128 = vor.u32 %v126, %v124
    %v130 = vshrl.u32 %v98, 16
    %v132 = vshll.u32 %v98, 16
    %v134 = vrot.slane %v132, 1
    %v135 = vor.u32 %v130, %v134
    %v137 = vshll.u32 %v95, 16
    %v139 = vrot.slane %v137, 1
    %v140 = vsel %vm105, %v135, %v139
    %v141 = vshrl.u32 %v95, 16
    %v143 = vor.u32 %v141, %v139
    %v145 = vshll.u32 %v96, 16
    %v147 = vrot.slane %v145, 1
    %v148 = vsel %vm105, %v143, %v147
    %v149 = vshrl.u32 %v96, 16
    %v151 = vor.u32 %v149, %v147
    %152 = vrot.lane.b32.xlu0 %v117, 32
    %v153 = vpop.permute.xlu0 %152
    %154 = vrot.lane.b32.xlu0 %v125, 32
    %v155 = vpop.permute.xlu0 %154
    %156 = vrot.lane.b32.xlu0 %v128, 32
    %v157 = vpop.permute.xlu0 %156
    %158 = vrot.lane.b32.xlu0 %v140, 32
    %v159 = vpop.permute.xlu0 %158
    %160 = vrot.lane.b32.xlu0 %v148, 32
    %v161 = vpop.permute.xlu0 %160
    %162 = vrot.lane.b32.xlu0 %v151, 32
    %v163 = vpop.permute.xlu0 %162
    %vm170 = vcmask 1046528
    %v171 = vrot.slane %v97, 1
    %v172 = vrot.slane %v92, 1
    %v173 = vsel %vm170, %v171, %v172
    %v174 = vrot.slane %v99, 1
    %v175 = vsel %vm170, %v172, %v174
    %v176 = vrot.slane %v98, 1
    %v177 = vrot.slane %v95, 1
    %v178 = vsel %vm170, %v176, %v177
    %v179 = vrot.slane %v100, 1
    %v180 = vsel %vm170, %v177, %v179
    %181 = vrot.lane.b32.xlu0 %v173, 64
    %v182 = vpop.permute.xlu0 %181
    %183 = vrot.lane.b32.xlu0 %v175, 64
    %v184 = vpop.permute.xlu0 %183
    %185 = vrot.lane.b32.xlu0 %v174, 64
    %v186 = vpop.permute.xlu0 %185
    %187 = vrot.lane.b32.xlu0 %v178, 64
    %v188 = vpop.permute.xlu0 %187
    %189 = vrot.lane.b32.xlu0 %v180, 64
    %v190 = vpop.permute.xlu0 %189
    %191 = vrot.lane.b32.xlu0 %v179, 64
    %v192 = vpop.permute.xlu0 %191
    %vm193 = vsmask.f32 6400
    %v195 = vshrl.u32 %v101, 16
    %v197 = vrot.slane %v195, 1
    %v198 = vshll.u32 %v101, 16
    %v200 = vrot.slane %v198, 2
    %v201 = vor.u32 %v197, %v200
    %v202 = vrot.slane %v118, 1
    %v203 = vrot.slane %v114, 2
    %v204 = vor.u32 %v202, %v203
    %v205 = vsel %vm193, %v201, %v204
    %v207 = vshrl.u32 %v99, 16
    %v209 = vrot.slane %v207, 1
    %v210 = vshll.u32 %v99, 16
    %v212 = vrot.slane %v210, 2
    %v213 = vor.u32 %v209, %v212
    %v214 = vsel %vm193, %v204, %v213
    %v216 = vshrl.u32 %v102, 16
    %v218 = vrot.slane %v216, 1
    %v219 = vshll.u32 %v102, 16
    %v221 = vrot.slane %v219, 2
    %v222 = vor.u32 %v218, %v221
    %v223 = vrot.slane %v141, 1
    %v224 = vrot.slane %v137, 2
    %v225 = vor.u32 %v223, %v224
    %v226 = vsel %vm193, %v222, %v225
    %v228 = vshrl.u32 %v100, 16
    %v230 = vrot.slane %v228, 1
    %v231 = vshll.u32 %v100, 16
    %v233 = vrot.slane %v231, 2
    %v234 = vor.u32 %v230, %v233
    %v235 = vsel %vm193, %v225, %v234
    %236 = vrot.lane.b32.xlu0 %v205, 96
    %v237 = vpop.permute.xlu0 %236
    %238 = vrot.lane.b32.xlu0 %v214, 96
    %v239 = vpop.permute.xlu0 %238
    %240 = vrot.lane.b32.xlu0 %v213, 96
    %v241 = vpop.permute.xlu0 %240
    %242 = vrot.lane.b32.xlu0 %v226, 96
    %v243 = vpop.permute.xlu0 %242
    %244 = vrot.lane.b32.xlu0 %v235, 96
    %v245 = vpop.permute.xlu0 %244
    %246 = vrot.lane.b32.xlu0 %v234, 96
    %v247 = vpop.permute.xlu0 %246
    %vm252 = vcmask 1045504
    %v253 = vrot.slane %v101, 2
    %v254 = vrot.slane %v92, 2
    %v255 = vsel %vm252, %v253, %v254
    %v256 = vrot.slane %v103, 2
    %v257 = vsel %vm252, %v254, %v256
    %v258 = vrot.slane %v102, 2
    %v259 = vrot.slane %v95, 2
    %v260 = vsel %vm252, %v258, %v259
    %v261 = vrot.slane %v104, 2
    %v262 = vsel %vm252, %v259, %v261
    %v265 = vsel %vm71, %v91, %v153
    %v267 = vsel %vm71, %v92, %v155
    %v269 = vsel %vm71, %v93, %v157
    %v272 = vsel %vm71, %v94, %v159
    %v274 = vsel %vm71, %v95, %v161
    %v276 = vsel %vm71, %v96, %v163
    %vm277 = vcmask 523264
    %v279 = vsel %vm277, %v265, %v182
    %v281 = vsel %vm277, %v267, %v184
    %v283 = vsel %vm277, %v269, %v186
    %v285 = vsel %vm277, %v272, %v188
    %v287 = vsel %vm277, %v274, %v190
    %v289 = vsel %vm277, %v276, %v192
    %vm290 = vcmask 785408
    %v292 = vsel %vm290, %v279, %v237
    %v294 = vsel %vm290, %v281, %v239
    %v296 = vsel %vm290, %v283, %v241
    %v298 = vsel %vm290, %v285, %v243
    %v300 = vsel %vm290, %v287, %v245
    %v302 = vsel %vm290, %v289, %v247
    %vm303 = vsmask.f32 5376
    %v304 = vshrl.u32 %v292, 16
    %v306 = vrot.slane %v304, 2
    %v307 = vshll.u32 %v292, 16
    %v309 = vrot.slane %v307, 3
    %v310 = vor.u32 %v306, %v309
    %v311 = vshrl.u32 %v294, 16
    %v313 = vrot.slane %v311, 2
    %v314 = vshll.u32 %v294, 16
    %v316 = vrot.slane %v314, 3
    %v317 = vor.u32 %v313, %v316
    %v318 = vsel %vm303, %v310, %v317
    %v320 = vshrl.u32 %v255, 16
    %v322 = vrot.slane %v320, 2
    %v323 = vshll.u32 %v255, 16
    %v325 = vrot.slane %v323, 3
    %v326 = vor.u32 %v322, %v325
    %v328 = vshrl.u32 %v257, 16
    %v330 = vrot.slane %v328, 2
    %v331 = vshll.u32 %v257, 16
    %v333 = vrot.slane %v331, 3
    %v334 = vor.u32 %v330, %v333
    %v335 = vsel %vm303, %v326, %v334
    %v336 = vshrl.u32 %v296, 16
    %v338 = vrot.slane %v336, 2
    %v339 = vshll.u32 %v296, 16
    %v341 = vrot.slane %v339, 3
    %v342 = vor.u32 %v338, %v341
    %v343 = vsel %vm303, %v317, %v342
    %v345 = vshrl.u32 %v256, 16
    %v347 = vrot.slane %v345, 2
    %v348 = vshll.u32 %v256, 16
    %v350 = vrot.slane %v348, 3
    %v351 = vor.u32 %v347, %v350
    %v352 = vsel %vm303, %v334, %v351
    %v353 = vshrl.u32 %v298, 16
    %v355 = vrot.slane %v353, 2
    %v356 = vshll.u32 %v298, 16
    %v358 = vrot.slane %v356, 3
    %v359 = vor.u32 %v355, %v358
    %v360 = vshrl.u32 %v300, 16
    %v362 = vrot.slane %v360, 2
    %v363 = vshll.u32 %v300, 16
    %v365 = vrot.slane %v363, 3
    %v366 = vor.u32 %v362, %v365
    %v367 = vsel %vm303, %v359, %v366
    %v369 = vshrl.u32 %v260, 16
    %v371 = vrot.slane %v369, 2
    %v372 = vshll.u32 %v260, 16
    %v374 = vrot.slane %v372, 3
    %v375 = vor.u32 %v371, %v374
    %v377 = vshrl.u32 %v262, 16
    %v379 = vrot.slane %v377, 2
    %v380 = vshll.u32 %v262, 16
    %v382 = vrot.slane %v380, 3
    %v383 = vor.u32 %v379, %v382
    %v384 = vsel %vm303, %v375, %v383
    %v385 = vshrl.u32 %v302, 16
    %v387 = vrot.slane %v385, 2
    %v388 = vshll.u32 %v302, 16
    %v390 = vrot.slane %v388, 3
    %v391 = vor.u32 %v387, %v390
    %v392 = vsel %vm303, %v366, %v391
    %v394 = vshrl.u32 %v261, 16
    %v396 = vrot.slane %v394, 2
    %v397 = vshll.u32 %v261, 16
    %v399 = vrot.slane %v397, 3
    %v400 = vor.u32 %v396, %v399
    %v401 = vsel %vm303, %v383, %v400
    %v406 = vld [vmem:[#allocation6] sm:$0xf]
    %v407 = vld [vmem:[#allocation6 + $0x4] sm:$0xf]
    %v408 = vld [vmem:[#allocation6 + $0x8] sm:$0xf]
    %v409 = vld [vmem:[#allocation6 + $0xc] sm:$0xf]
    %v410 = vld [vmem:[#allocation6 + $0x10] sm:$0xf]
    %v411 = vld [vmem:[#allocation6 + $0x14] sm:$0xf]
    %v412 = vld [vmem:[#allocation6 + $0x18] sm:$0xf]
    %v413 = vld [vmem:[#allocation6 + $0x1c] sm:$0xf]
    %v414 = vld [vmem:[#allocation6 + $0x20] sm:$0xf]
    %v415 = vld [vmem:[#allocation6 + $0x24] sm:$0xf]
    %v416 = vld [vmem:[#allocation6 + $0x28] sm:$0xf]
    %v417 = vld [vmem:[#allocation6 + $0x2c] sm:$0xf]
    %v418 = vld [vmem:[#allocation6 + $0x30] sm:$0xf]
    %v419 = vld [vmem:[#allocation6 + $0x34] sm:$0xf]
    %v420 = vld [vmem:[#allocation6 + $0x38] sm:$0xf]
    %v421 = vld [vmem:[#allocation6 + $0x3c] sm:$0xf]
    %v422 = vld [vmem:[#allocation6 + $0x40] sm:$0xf]
    %v423 = vld [vmem:[#allocation6 + $0x44] sm:$0xf]
    %v424 = vld [vmem:[#allocation6 + $0x48] sm:$0xf]
    %v425 = vld [vmem:[#allocation6 + $0x4c] sm:$0xf]
    %v446 = vunpack.c.l.b16 %v406
    %v447 = vunpack.c.l.b16 %v407
    %v448 = vunpack.c.l.b16 %v408
    %v449 = vunpack.c.l.b16 %v409
    %v450 = vunpack.c.l.b16 %v410
    %v451 = vunpack.c.l.b16 %v411
    %v452 = vunpack.c.l.b16 %v412
    %v453 = vunpack.c.l.b16 %v413
    %v454 = vunpack.c.l.b16 %v414
    %v455 = vunpack.c.l.b16 %v415
    %v456 = vunpack.c.l.b16 %v416
    %v457 = vunpack.c.l.b16 %v417
    %v458 = vunpack.c.l.b16 %v418
    %v459 = vunpack.c.l.b16 %v419
    %v460 = vunpack.c.l.b16 %v420
    %v461 = vunpack.c.l.b16 %v421
    %v462 = vunpack.c.l.b16 %v422
    %v463 = vunpack.c.l.b16 %v423
    %v464 = vunpack.c.l.b16 %v424
    %v465 = vunpack.c.l.b16 %v425
    %v466 = vpack.c.b16 %v447, %v446
    %v467 = vpack.c.b16 %v449, %v448
    %v468 = vpack.c.b16 %v451, %v450
    %v469 = vpack.c.b16 %v453, %v452
    %v470 = vpack.c.b16 %v455, %v454
    %v471 = vpack.c.b16 %v457, %v456
    %v472 = vpack.c.b16 %v459, %v458
    %v473 = vpack.c.b16 %v461, %v460
    %v474 = vpack.c.b16 %v463, %v462
    %v475 = vpack.c.b16 %v465, %v464
    %v487 = vsel %vm71, %v335, 0
    %v490 = vsel %vm71, %v352, 0
    %v493 = vsel %vm71, %v384, 0
    %v496 = vsel %vm71, %v401, 0
    %498 = vmatprep.subr.bf16.mxu0 0
    %499 = vmatpush1.bf16.msra.mxu0 %v466
    %500 = vmatprep.subr.bf16.mxu0 0
    %501 = vmatpush1.bf16.msra.mxu0 %v467
    %502 = vmatprep.subr.bf16.mxu0 0
    %503 = vmatpush1.bf16.msra.mxu0 %v468
    %504 = vmatprep.subr.bf16.mxu0 0
    %505 = vmatpush1.bf16.msra.mxu0 %v469
    %506 = vmatprep.subr.bf16.mxu0 0
    %507 = vmatpush1.bf16.msra.mxu0 %v470
    %508 = vmatprep.subr.bf16.mxu0 0
    %509 = vmatpush1.bf16.msra.mxu0 %v471
    %510 = vmatprep.subr.bf16.mxu0 0
    %511 = vmatpush1.bf16.msra.mxu0 %v472
    %512 = vmatprep.subr.bf16.mxu0 0
    %513 = vmatpush1.bf16.msra.mxu0 %v473
    %514 = vmatprep.subr.bf16.mxu0 0
    %515 = vmatpush1.bf16.msra.mxu0 %v474
    %516 = vmatprep.subr.bf16.mxu0 0
    %517 = vmatpush1.bf16.msra.mxu0 %v475
    %518 = vmatprep.subr.bf16.mxu0 0
    %519 = vmatpush1.bf16.msra.mxu0 0
    %520 = vmatprep.subr.bf16.mxu0 0
    %521 = vmatpush1.bf16.msra.mxu0 0
    %522 = vmatprep.subr.bf16.mxu0 0
    %523 = vmatpush1.bf16.msra.mxu0 0
    %524 = vmatprep.subr.bf16.mxu0 0
    %525 = vmatpush1.bf16.msra.mxu0 0
    %526 = vmatprep.subr.bf16.mxu0 0
    %527 = vmatpush1.bf16.msra.mxu0 0
    %528 = vmatprep.subr.bf16.mxu0 0
    %529 = vmatpush1.bf16.msra.mxu0 0
    %530 = vmatprep.mubr.bf16.mxu0 %v487
    %531 = vmatmul.mubr.bf16.gmra.mrb[0].mxu0 %v318
    %v532 = vpop.f32.mrb[0].mxu0
    %v533 = vadd.f32 0.0, %v532
    %v534 = vpop.f32.mrb[0].mxu0
    %v535 = vpop.f32.mrb[0].mxu0
    %v536 = vadd.f32 0.0, %v535
    %v537 = vpop.f32.mrb[0].mxu0
    %538 = vmatprep.mubr.bf16.mxu0 %v490
    %539 = vmatmul.mubr.bf16.gmra.mrb[0].mxu0 %v343
    %v540 = vpop.f32.mrb[0].mxu0
    %v541 = vadd.f32 0.0, %v540
    %v542 = vpop.f32.mrb[0].mxu0
    %v543 = vpop.f32.mrb[0].mxu0
    %v544 = vadd.f32 0.0, %v543
    %v545 = vpop.f32.mrb[0].mxu0
    %546 = vmatprep.mubr.bf16.mxu0 %v493
    %547 = vmatmul.mubr.bf16.gmra.mrb[0].mxu0 %v367
    %v548 = vpop.f32.mrb[0].mxu0
    %v549 = vadd.f32 0.0, %v548
    %v550 = vpop.f32.mrb[0].mxu0
    %v551 = vpop.f32.mrb[0].mxu0
    %v552 = vadd.f32 0.0, %v551
    %v553 = vpop.f32.mrb[0].mxu0
    %554 = vmatprep.mubr.bf16.mxu0 %v496
    %555 = vmatmul.mubr.bf16.gmra.mrb[0].mxu0 %v392
    %v556 = vpop.f32.mrb[0].mxu0
    %v557 = vadd.f32 0.0, %v556
    %v558 = vpop.f32.mrb[0].mxu0
    %v559 = vpop.f32.mrb[0].mxu0
    %v560 = vadd.f32 0.0, %v559
    %v561 = vpop.f32.mrb[0].mxu0
    %562 = vdwg.mxu0
    %v563 = vmax.f32 %v533, %v536
    %v564 = vrot.slane %v563, 4
    %v565 = vmax.f32 %v563, %v564
    %v566 = vrot.slane %v565, 2
    %v567 = vmax.f32 %v565, %v566
    %v568 = vrot.slane %v567, 1
    %v569 = vmax.f32 %v567, %v568
    %v570 = vmax.f32 %v549, %v552
    %v571 = vrot.slane %v570, 4
    %v572 = vmax.f32 %v570, %v571
    %v573 = vrot.slane %v572, 2
    %v574 = vmax.f32 %v572, %v573
    %v575 = vrot.slane %v574, 1
    %v576 = vmax.f32 %v574, %v575
    %v577 = vld [vmem:[%s5] sm:$0xff]
    %v578 = vld [vmem:[%s5 + $0x8] sm:$0xff]
    %v579 = vadd.f32 %v541, %v577
    %v580 = vadd.f32 %v544, %v578
    %v581 = vadd.f32 %v557, %v577
    %v582 = vadd.f32 %v560, %v578
    %v583 = vmax.f32 %v579, %v580
    %v584 = vrot.slane %v583, 4
    %v585 = vmax.f32 %v583, %v584
    %v586 = vrot.slane %v585, 2
    %v587 = vmax.f32 %v585, %v586
    %v588 = vrot.slane %v587, 1
    %v589 = vmax.f32 %v587, %v588
    %v590 = vmax.f32 %v581, %v582
    %v591 = vrot.slane %v590, 4
    %v592 = vmax.f32 %v590, %v591
    %v593 = vrot.slane %v592, 2
    %v594 = vmax.f32 %v592, %v593
    %v595 = vrot.slane %v594, 1
    %v596 = vmax.f32 %v594, %v595
    %v597 = vmax.f32 %v569, %v589
    %v598 = vmax.f32 %v576, %v596
    %v599 = vld [vmem:[%s2] sm:$0x1]
    %v601 = vlaneseq
    %v602 = vshrl.u32 %v601, 7
    %v603 = vsub.s32 0, %v602
    %v604 = vrot.slane %v599, %v603
    %v606 = vadd.f32 %v597, %v604
    %v607 = vadd.f32 %v598, %v604
    %v608 = vmax.f32 %v606, 0.0
    %v609 = vmax.f32 %v607, 0.0
    %v610 = vpack.c.bf16 %v608, %v608
    %v611 = vpack.c.bf16 %v609, %v609
    %v612 = vld [vmem:[#allocation8] sm:$0xf]
    %v613 = vld [vmem:[#allocation8 + $0x4] sm:$0xf]
    %v614 = vld [vmem:[#allocation8 + $0x8] sm:$0xf]
    %v615 = vld [vmem:[#allocation8 + $0xc] sm:$0xf]
    %v616 = vld [vmem:[#allocation8 + $0x10] sm:$0xf]
    %v617 = vld [vmem:[#allocation8 + $0x14] sm:$0xf]
    %v618 = vld [vmem:[#allocation8 + $0x18] sm:$0xf]
    %v619 = vld [vmem:[#allocation8 + $0x1c] sm:$0xf]
    %v620 = vld [vmem:[#allocation8 + $0x20] sm:$0xf]
    %v621 = vld [vmem:[#allocation8 + $0x24] sm:$0xf]
    %v622 = vld [vmem:[#allocation8 + $0x28] sm:$0xf]
    %v623 = vld [vmem:[#allocation8 + $0x2c] sm:$0xf]
    %v624 = vld [vmem:[#allocation8 + $0x30] sm:$0xf]
    %v625 = vld [vmem:[#allocation8 + $0x34] sm:$0xf]
    %v626 = vld [vmem:[#allocation8 + $0x38] sm:$0xf]
    %v627 = vld [vmem:[#allocation8 + $0x3c] sm:$0xf]
    %v628 = vld [vmem:[%s4] sm:$0x1]
    %v630 = vlaneseq
    %v631 = vshrl.u32 %v630, 7
    %v632 = vsub.s32 0, %v631
    %v633 = vrot.slane %v628, %v632
    %v637 = vunpack.c.l.b16 %v610
    %v638 = vunpack.c.l.b16 %v611
    %v639 = vrot.slane %v638, 7
    %vm640 = vcmask 1041409
    %v641 = vsel %vm640, %v639, %v637
    %v642 = vpack.c.b16 %v641, %v641
    %v660 = vunpack.c.l.b16 %v612
    %v661 = vunpack.c.l.b16 %v613
    %v662 = vunpack.c.l.b16 %v614
    %v663 = vunpack.c.l.b16 %v615
    %v664 = vunpack.c.l.b16 %v616
    %v665 = vunpack.c.l.b16 %v617
    %v666 = vunpack.c.l.b16 %v618
    %v667 = vunpack.c.l.b16 %v619
    %v668 = vunpack.c.l.b16 %v620
    %v669 = vunpack.c.l.b16 %v621
    %v670 = vunpack.c.l.b16 %v622
    %v671 = vunpack.c.l.b16 %v623
    %v672 = vunpack.c.l.b16 %v624
    %v673 = vunpack.c.l.b16 %v625
    %v674 = vunpack.c.l.b16 %v626
    %v675 = vunpack.c.l.b16 %v627
    %v676 = vpack.c.b16 %v661, %v660
    %v677 = vpack.c.b16 %v663, %v662
    %v678 = vpack.c.b16 %v665, %v664
    %v679 = vpack.c.b16 %v667, %v666
    %v680 = vpack.c.b16 %v669, %v668
    %v681 = vpack.c.b16 %v671, %v670
    %v682 = vpack.c.b16 %v673, %v672
    %v683 = vpack.c.b16 %v675, %v674
    %692 = vmatprep.subr.bf16.mxu0 0
    %693 = vmatpush1.bf16.msra.mxu0 %v676
    %694 = vmatprep.subr.bf16.mxu0 0
    %695 = vmatpush1.bf16.msra.mxu0 %v677
    %696 = vmatprep.subr.bf16.mxu0 0
    %697 = vmatpush1.bf16.msra.mxu0 %v678
    %698 = vmatprep.subr.bf16.mxu0 0
    %699 = vmatpush1.bf16.msra.mxu0 %v679
    %700 = vmatprep.subr.bf16.mxu0 0
    %701 = vmatpush1.bf16.msra.mxu0 %v680
    %702 = vmatprep.subr.bf16.mxu0 0
    %703 = vmatpush1.bf16.msra.mxu0 %v681
    %704 = vmatprep.subr.bf16.mxu0 0
    %705 = vmatpush1.bf16.msra.mxu0 %v682
    %706 = vmatprep.subr.bf16.mxu0 0
    %707 = vmatpush1.bf16.msra.mxu0 %v683
    %708 = vmatprep.subr.bf16.mxu0 0
    %709 = vmatpush1.bf16.msra.mxu0 0
    %710 = vmatprep.subr.bf16.mxu0 0
    %711 = vmatpush1.bf16.msra.mxu0 0
    %712 = vmatprep.subr.bf16.mxu0 0
    %713 = vmatpush1.bf16.msra.mxu0 0
    %714 = vmatprep.subr.bf16.mxu0 0
    %715 = vmatpush1.bf16.msra.mxu0 0
    %716 = vmatprep.subr.bf16.mxu0 0
    %717 = vmatpush1.bf16.msra.mxu0 0
    %718 = vmatprep.subr.bf16.mxu0 0
    %719 = vmatpush1.bf16.msra.mxu0 0
    %720 = vmatprep.subr.bf16.mxu0 0
    %721 = vmatpush1.bf16.msra.mxu0 0
    %722 = vmatprep.subr.bf16.mxu0 0
    %723 = vmatpush1.bf16.msra.mxu0 0
    %724 = vmatprep.mubr.bf16.mxu0 0
    %725 = vmatmul.mubr.bf16.gmra.mrb[0].mxu0 %v642
    %v726 = vpop.f32.mrb[0].mxu0
    %v727 = vadd.f32 %v633, %v726
    %v728 = vpop.f32.mrb[0].mxu0
    %v729 = vpop.f32.mrb[0].mxu0
    %v730 = vpop.f32.mrb[0].mxu0
    %731 = vdwg.mxu0
    %732 = vst [vmem:[#allocation9] sm:$0x3] %v727
    // Predicated region
    $region38: #{tpu_custom_call.1} parent=1 // pred_check
      _
    $region39: #{tpu_custom_call.1} parent=1 // pred_check_branch
      %734 = sbr.rel (0) target = $region41
    $region40: #{tpu_custom_call.1} parent=1 // pred_region
      %s736 = ssub.s32 32, 32
      %737 = vsyncadd [#allocation5], %s736
      %s739 = sshll.u32 [#allocation9], 4
      %s740 = int_to_ptr.vmem [resolvable:$true] %s739
      %742 = dma.vmem_to_hbm [thread:$0]  %s740, 32, %s6, [#allocation5]
    $region41: #{tpu_custom_call.1} parent=1 // pred_fallthru
      _
    // Predicated region
    $region42: #{tpu_custom_call.1} parent=1 // pred_check
      _
    $region43: #{tpu_custom_call.1} parent=1 // pred_check_branch
      %744 = sbr.rel (0) target = $region45
    $region44: #{tpu_custom_call.1} parent=1 // pred_region
      %745 = dma.done [#allocation5], 32
    $region45: #{tpu_custom_call.1} parent=1 // pred_fallthru
      _
    %746 = vsyncpa [#allocation4], 1
    %747 = vsyncpa [#allocation7], 1
    %748 = vsyncpa [#allocation5], 1

</llo_original>
